<compile_context>
chip_gen: v7x
topology: tpu7x:2x2x1
jax: 0.10.0
libtpu: 0.0.40
codegen_flags: <defaults>
</compile_context>

<pallas_src>
import math
import jax
import jax.numpy as jnp
from jax import lax
from jax.experimental import pallas as pl
from jax.experimental.pallas import tpu as pltpu

STATE_DIM = 2          # FlightAttitudeSimulator 2-state
ACTION_DIM = 1
HIDDEN = 64
WIDE = 2 * HIDDEN      # fused actor+critic hidden width == TPU lane width (128)
ACTION_STD_INIT = 0.6
LOG_2PI = math.log(2.0 * math.pi)


def _ppo_fused_kernel(s_ref, a_ref, w1_ref, w2_ref, w3_ref, bias_ref, out_ref):
    """Fused actor+critic MLP + diagonal-Gaussian log-prob; one lane-dense output slab."""
    A = ACTION_DIM
    s = s_ref[...]                                    # (TB, S) f32

    b1 = bias_ref[0:1, :]                             # (1,128) [actor b1 | critic b1]
    b2 = bias_ref[1:2, :]                             # (1,128) [actor b2 | critic b2]
    b3 = bias_ref[2:3, :]                             # lanes 0..A-1 = ab3, lane A = cb3
    aux = bias_ref[3:4, :]                            # lanes 0..A-1 = 1/var, lane A = logp const

    # Layers 1 & 2: both branches end in tanh -> one 128-lane matmul each.
    h = jnp.tanh(jnp.dot(s, w1_ref[...], preferred_element_type=jnp.float32) + b1)
    h = jnp.tanh(jnp.dot(h, w2_ref[...], preferred_element_type=jnp.float32) + b2)
    # Layer 3: actor head in lanes 0..A-1, critic head in lane A, rest zero.
    pre3 = jnp.dot(h, w3_ref[...], preferred_element_type=jnp.float32) + b3   # (TB, 128)

    mean_slab = jnp.tanh(pre3)                        # actor mean lives in lanes 0..A-1
    mean = mean_slab[:, :A]                           # (TB, A)
    value = pre3[:, A:A + 1]                          # (TB, 1) critic value (no tanh)

    # diagonal MultivariateNormal log-prob (1/var and additive constant precomputed)
    diff = a_ref[...] - mean                          # (TB, A)
    maha = jnp.sum(diff * diff * aux[:, :A], axis=-1, keepdims=True)   # (TB, 1)
    logp = -0.5 * maha + aux[:, A:A + 1]              # (TB, 1)

    # Pack into one lane-dense slab: lanes [0..A-1]=mean, [A]=logp, [A+1]=value.
    lane = lax.broadcasted_iota(jnp.int32, out_ref.shape, 1)
    packed = jnp.where(lane < A, mean_slab, 0.0)
    packed = packed + jnp.where(lane == A, logp, 0.0)
    packed = packed + jnp.where(lane == A + 1, value, 0.0)
    out_ref[...] = packed


def _round_up(x, m):
    return (x + m - 1) // m * m


def pack_params(params, action_var):
    """One-time packing of the 12 Linear params (+ action_var) into fused kernel slabs.

    NOTE: must be re-run if action_var changes (set_action_std)."""
    A = ACTION_DIM
    f32 = jnp.float32

    w1 = jnp.concatenate([params["aw1"], params["cw1"]], axis=1).astype(f32)      # (S, 128)

    w2 = jnp.zeros((WIDE, WIDE), f32)                                             # blockdiag
    w2 = w2.at[:HIDDEN, :HIDDEN].set(params["aw2"])
    w2 = w2.at[HIDDEN:, HIDDEN:].set(params["cw2"])

    w3 = jnp.zeros((WIDE, WIDE), f32)                                             # heads, padded
    w3 = w3.at[:HIDDEN, :A].set(params["aw3"])
    w3 = w3.at[HIDDEN:, A:A + 1].set(params["cw3"])

    b1 = jnp.concatenate([params["ab1"], params["cb1"]], axis=1).astype(f32)      # (1,128)
    b2 = jnp.concatenate([params["ab2"], params["cb2"]], axis=1).astype(f32)      # (1,128)
    b3 = jnp.zeros((1, WIDE), f32)
    b3 = b3.at[0, :A].set(params["ab3"][0])
    b3 = b3.at[0, A].set(params["cb3"][0, 0])

    var = action_var.astype(f32).reshape(A)
    log_det = jnp.sum(jnp.log(var))
    logp_const = -0.5 * log_det - 0.5 * A * LOG_2PI
    aux = jnp.zeros((1, WIDE), f32)
    aux = aux.at[0, :A].set(1.0 / var)
    aux = aux.at[0, A].set(logp_const)

    bias = jnp.concatenate([b1, b2, b3, aux], axis=0)                             # (4, 128)
    entropy = 0.5 * A * (1.0 + LOG_2PI) + 0.5 * log_det                           # scalar
    return {"w1": w1, "w2": w2, "w3": w3, "bias": bias, "entropy": entropy}


def ppo_actor_critic_evaluate(s, a, packed, *, block_b=512):
    """PPOActorCritic.evaluate semantics via one fused Pallas kernel.

    Returns (action_mean (B,A), action_logprobs (B,), state_values (B,1), entropy (B,))."""
    B = s.shape[0]
    a = a.reshape(-1, ACTION_DIM).astype(jnp.float32)   # mirrors module reshape for action_dim==1
    s = s.astype(jnp.float32)

    tb = min(block_b, _round_up(B, 8))                   # batch tile (multiple of 8 sublanes)
    b_pad = _round_up(B, tb)
    if b_pad != B:
        s = jnp.pad(s, ((0, b_pad - B), (0, 0)))
        a = jnp.pad(a, ((0, b_pad - B), (0, 0)))

    out = pl.pallas_call(
        _ppo_fused_kernel,
        out_shape=jax.ShapeDtypeStruct((b_pad, WIDE), jnp.float32),
        grid=(b_pad // tb,),
        in_specs=[
            pl.BlockSpec((tb, STATE_DIM), lambda i: (i, 0)),       # s: batch-tiled
            pl.BlockSpec((tb, ACTION_DIM), lambda i: (i, 0)),      # a: batch-tiled
            pl.BlockSpec((STATE_DIM, WIDE), lambda i: (0, 0)),     # fused weights: resident
            pl.BlockSpec((WIDE, WIDE), lambda i: (0, 0)),
            pl.BlockSpec((WIDE, WIDE), lambda i: (0, 0)),
            pl.BlockSpec((4, WIDE), lambda i: (0, 0)),             # bias/aux slab: resident
        ],
        out_specs=pl.BlockSpec((tb, WIDE), lambda i: (i, 0)),      # lane-dense packed output
        compiler_params=pltpu.CompilerParams(dimension_semantics=("parallel",)),
    )(s, a, packed["w1"], packed["w2"], packed["w3"], packed["bias"])

    mean = out[:B, :ACTION_DIM]
    logp = out[:B, ACTION_DIM]
    val = out[:B, ACTION_DIM + 1:ACTION_DIM + 2]
    ent = jnp.broadcast_to(packed["entropy"], (B,))
    return mean, logp, val, ent


def init_params(key):
    """Deterministic synthetic parameters; weights stored as (in, out) = nn.Linear W^T."""
    ks = jax.random.split(key, 12)

    def w(k, fan_in, fan_out):
        bound = 1.0 / math.sqrt(fan_in)
        return jax.random.uniform(k, (fan_in, fan_out), jnp.float32, -bound, bound)

    def b(k, fan_in, fan_out):
        bound = 1.0 / math.sqrt(fan_in)
        return jax.random.uniform(k, (1, fan_out), jnp.float32, -bound, bound)

    return {
        "aw1": w(ks[0], STATE_DIM, HIDDEN), "ab1": b(ks[1], STATE_DIM, HIDDEN),
        "aw2": w(ks[2], HIDDEN, HIDDEN),    "ab2": b(ks[3], HIDDEN, HIDDEN),
        "aw3": w(ks[4], HIDDEN, ACTION_DIM), "ab3": b(ks[5], HIDDEN, ACTION_DIM),
        "cw1": w(ks[6], STATE_DIM, HIDDEN), "cb1": b(ks[7], STATE_DIM, HIDDEN),
        "cw2": w(ks[8], HIDDEN, HIDDEN),    "cb2": b(ks[9], HIDDEN, HIDDEN),
        "cw3": w(ks[10], HIDDEN, 1),        "cb3": b(ks[11], HIDDEN, 1),
    }


def _reference(s, a, p, action_var):
    """Pure-JAX reference of PPOActorCritic.evaluate."""
    h = jnp.tanh(s @ p["aw1"] + p["ab1"])
    h = jnp.tanh(h @ p["aw2"] + p["ab2"])
    mean = jnp.tanh(h @ p["aw3"] + p["ab3"])
    hc = jnp.tanh(s @ p["cw1"] + p["cb1"])
    hc = jnp.tanh(hc @ p["cw2"] + p["cb2"])
    val = hc @ p["cw3"] + p["cb3"]
    var = action_var.reshape(1, -1)
    log_det = jnp.sum(jnp.log(var), axis=-1)
    maha = jnp.sum((a - mean) ** 2 / var, axis=-1)
    k = ACTION_DIM
    logp = -0.5 * maha - 0.5 * log_det - 0.5 * k * LOG_2PI
    ent = jnp.broadcast_to(0.5 * k * (1.0 + LOG_2PI) + 0.5 * log_det, (s.shape[0],))
    return mean, logp, val, ent


# TODO(synk): act()'s dist.sample() (RNG draw) and checkpoint save/load are not implemented;
#             only the evaluate() forward path is translated.

if __name__ == "__main__":
    key = jax.random.PRNGKey(0)
    k_param, k_s, k_a, k_s2, k_a2 = jax.random.split(key, 5)

    params = init_params(k_param)
    action_var = jnp.full((ACTION_DIM,), ACTION_STD_INIT * ACTION_STD_INIT, jnp.float32)
    packed = pack_params(params, action_var)

    # --- small batch (single block) ---
    B = 8
    s = jax.random.normal(k_s, (B, STATE_DIM), jnp.float32)
    a = jax.random.normal(k_a, (B, ACTION_DIM), jnp.float32)
    mean, logp, val, ent = jax.block_until_ready(ppo_actor_critic_evaluate(s, a, packed))
    r_mean, r_logp, r_val, r_ent = _reference(s, a, params, action_var)
    assert jnp.allclose(mean, r_mean, atol=1e-5)
    assert jnp.allclose(logp, r_logp, atol=1e-5)
    assert jnp.allclose(val, r_val, atol=1e-5)
    assert jnp.allclose(ent, r_ent, atol=1e-5)

    # --- ragged batch exercising the batch-parallel grid (padding + resident weights) ---
    B2 = 300
    s2 = jax.random.normal(k_s2, (B2, STATE_DIM), jnp.float32)
    a2 = jax.random.normal(k_a2, (B2, ACTION_DIM), jnp.float32)
    mean2, logp2, val2, ent2 = jax.block_until_ready(
        ppo_actor_critic_evaluate(s2, a2, packed, block_b=128))
    r_mean2, r_logp2, r_val2, r_ent2 = _reference(s2, a2, params, action_var)
    assert jnp.allclose(mean2, r_mean2, atol=1e-5)
    assert jnp.allclose(logp2, r_logp2, atol=1e-5)
    assert jnp.allclose(val2, r_val2, atol=1e-5)
    assert jnp.allclose(ent2, r_ent2, atol=1e-5)

    print("KERNEL_OK")
</pallas_src>

<mosaic_0001>
module attributes {stable_mosaic.version = 11 : i64} {
  func.func @_ppo_fused_kernel(%arg0: i32, %arg1: memref<8x2xf32, #tpu.memory_space<vmem>>, %arg2: memref<8x1xf32, #tpu.memory_space<vmem>>, %arg3: memref<2x128xf32, #tpu.memory_space<vmem>>, %arg4: memref<128x128xf32, #tpu.memory_space<vmem>>, %arg5: memref<128x128xf32, #tpu.memory_space<vmem>>, %arg6: memref<4x128xf32, #tpu.memory_space<vmem>>, %arg7: memref<8x128xf32, #tpu.memory_space<vmem>>) attributes {dimension_semantics = [#tpu.dimension_semantics<parallel>], iteration_bounds = array<i64: 1>, scalar_prefetch = 0 : i64, scratch_operands = 0 : i64, tpu.core_type = #tpu.core_type<tc>, window_params = [{transform_indices = @transform_0, window_bounds = array<i64: 8, 2>}, {transform_indices = @transform_1, window_bounds = array<i64: 8, 1>}, {pipeline_mode = #tpu.pipeline_mode<synchronous>, transform_indices = @transform_2, window_bounds = array<i64: 2, 128>}, {pipeline_mode = #tpu.pipeline_mode<synchronous>, transform_indices = @transform_3, window_bounds = array<i64: 128, 128>}, {pipeline_mode = #tpu.pipeline_mode<synchronous>, transform_indices = @transform_4, window_bounds = array<i64: 128, 128>}, {pipeline_mode = #tpu.pipeline_mode<synchronous>, transform_indices = @transform_5, window_bounds = array<i64: 4, 128>}, {transform_indices = @transform_6, window_bounds = array<i64: 8, 128>}]} {
    %c0 = arith.constant 0 : index
    %c0_0 = arith.constant 0 : index
    %0 = vector.load %arg1[%c0, %c0_0] : memref<8x2xf32, #tpu.memory_space<vmem>>, vector<8x2xf32>
    %c0_1 = arith.constant 0 : index
    %c0_2 = arith.constant 0 : index
    %1 = vector.load %arg6[%c0_1, %c0_2] : memref<4x128xf32, #tpu.memory_space<vmem>>, vector<1x128xf32>
    %c1 = arith.constant 1 : index
    %c0_3 = arith.constant 0 : index
    %2 = vector.load %arg6[%c1, %c0_3] : memref<4x128xf32, #tpu.memory_space<vmem>>, vector<1x128xf32>
    %c2 = arith.constant 2 : index
    %c0_4 = arith.constant 0 : index
    %3 = vector.load %arg6[%c2, %c0_4] : memref<4x128xf32, #tpu.memory_space<vmem>>, vector<1x128xf32>
    %c3 = arith.constant 3 : index
    %c0_5 = arith.constant 0 : index
    %4 = vector.load %arg6[%c3, %c0_5] : memref<4x128xf32, #tpu.memory_space<vmem>>, vector<1x128xf32>
    %c0_6 = arith.constant 0 : index
    %c0_7 = arith.constant 0 : index
    %5 = vector.load %arg3[%c0_6, %c0_7] : memref<2x128xf32, #tpu.memory_space<vmem>>, vector<2x128xf32>
    %cst = arith.constant dense<0.000000e+00> : vector<8x128xf32>
    %6 = tpu.matmul %0, %5, %cst {dimension_numbers = #tpu.dot_dimension_numbers<[1], [0], [0], [1], [0, 0, 1, 1], [], []>} : vector<8x2xf32>, vector<2x128xf32>, vector<8x128xf32> -> vector<8x128xf32>
    %7 = vector.broadcast %1 : vector<1x128xf32> to vector<8x128xf32>
    %8 = arith.addf %6, %7 : vector<8x128xf32>
    %9 = math.tanh %8 : vector<8x128xf32>
    %c0_8 = arith.constant 0 : index
    %c0_9 = arith.constant 0 : index
    %10 = vector.load %arg4[%c0_8, %c0_9] : memref<128x128xf32, #tpu.memory_space<vmem>>, vector<128x128xf32>
    %cst_10 = arith.constant dense<0.000000e+00> : vector<8x128xf32>
    %11 = tpu.matmul %9, %10, %cst_10 {dimension_numbers = #tpu.dot_dimension_numbers<[1], [0], [0], [1], [0, 0, 1, 1], [], []>} : vector<8x128xf32>, vector<128x128xf32>, vector<8x128xf32> -> vector<8x128xf32>
    %12 = vector.broadcast %2 : vector<1x128xf32> to vector<8x128xf32>
    %13 = arith.addf %11, %12 : vector<8x128xf32>
    %14 = math.tanh %13 : vector<8x128xf32>
    %c0_11 = arith.constant 0 : index
    %c0_12 = arith.constant 0 : index
    %15 = vector.load %arg5[%c0_11, %c0_12] : memref<128x128xf32, #tpu.memory_space<vmem>>, vector<128x128xf32>
    %cst_13 = arith.constant dense<0.000000e+00> : vector<8x128xf32>
    %16 = tpu.matmul %14, %15, %cst_13 {dimension_numbers = #tpu.dot_dimension_numbers<[1], [0], [0], [1], [0, 0, 1, 1], [], []>} : vector<8x128xf32>, vector<128x128xf32>, vector<8x128xf32> -> vector<8x128xf32>
    %17 = vector.broadcast %3 : vector<1x128xf32> to vector<8x128xf32>
    %18 = arith.addf %16, %17 : vector<8x128xf32>
    %19 = math.tanh %18 : vector<8x128xf32>
    %20 = vector.extract_strided_slice %19 {offsets = [0, 0], sizes = [8, 1], strides = [1, 1]} : vector<8x128xf32> to vector<8x1xf32>
    %21 = vector.extract_strided_slice %18 {offsets = [0, 1], sizes = [8, 1], strides = [1, 1]} : vector<8x128xf32> to vector<8x1xf32>
    %c0_14 = arith.constant 0 : index
    %c0_15 = arith.constant 0 : index
    %22 = vector.load %arg2[%c0_14, %c0_15] : memref<8x1xf32, #tpu.memory_space<vmem>>, vector<8x1xf32>
    %23 = arith.subf %22, %20 : vector<8x1xf32>
    %24 = arith.mulf %23, %23 : vector<8x1xf32>
    %25 = vector.extract_strided_slice %4 {offsets = [0, 0], sizes = [1, 1], strides = [1, 1]} : vector<1x128xf32> to vector<1x1xf32>
    %26 = vector.broadcast %25 : vector<1x1xf32> to vector<8x1xf32>
    %27 = arith.mulf %24, %26 : vector<8x1xf32>
    %cst_16 = arith.constant dense<0.000000e+00> : vector<8xf32>
    %28 = vector.multi_reduction <add>, %27, %cst_16 [1] : vector<8x1xf32> to vector<8xf32>
    %29 = vector.shape_cast %28 : vector<8xf32> to vector<8x1xf32>
    %cst_17 = arith.constant -5.000000e-01 : f32
    %30 = vector.broadcast %cst_17 : f32 to vector<8x1xf32>
    %31 = arith.mulf %30, %29 : vector<8x1xf32>
    %32 = vector.extract_strided_slice %4 {offsets = [0, 1], sizes = [1, 1], strides = [1, 1]} : vector<1x128xf32> to vector<1x1xf32>
    %33 = vector.broadcast %32 : vector<1x1xf32> to vector<8x1xf32>
    %34 = arith.addf %31, %33 : vector<8x1xf32>
    %35 = tpu.iota {dimensions = array<i32: 1>} : vector<8x128xi32>
    %c1_i32 = arith.constant 1 : i32
    %36 = vector.broadcast %c1_i32 : i32 to vector<8x128xi32>
    %37 = arith.cmpi slt, %35, %36 : vector<8x128xi32>
    %cst_18 = arith.constant 0.000000e+00 : f32
    %38 = vector.broadcast %cst_18 : f32 to vector<8x128xf32>
    %39 = arith.select %37, %19, %38 : vector<8x128xi1>, vector<8x128xf32>
    %c1_i32_19 = arith.constant 1 : i32
    %40 = vector.broadcast %c1_i32_19 : i32 to vector<8x128xi32>
    %41 = arith.cmpi eq, %35, %40 : vector<8x128xi32>
    %cst_20 = arith.constant 0.000000e+00 : f32
    %42 = vector.shape_cast %34 : vector<8x1xf32> to vector<8x1xf32>
    %43 = vector.broadcast %42 : vector<8x1xf32> to vector<8x128xf32>
    %44 = vector.broadcast %cst_20 : f32 to vector<8x128xf32>
    %45 = arith.select %41, %43, %44 : vector<8x128xi1>, vector<8x128xf32>
    %46 = arith.addf %39, %45 : vector<8x128xf32>
    %c2_i32 = arith.constant 2 : i32
    %47 = vector.broadcast %c2_i32 : i32 to vector<8x128xi32>
    %48 = arith.cmpi eq, %35, %47 : vector<8x128xi32>
    %cst_21 = arith.constant 0.000000e+00 : f32
    %49 = vector.shape_cast %21 : vector<8x1xf32> to vector<8x1xf32>
    %50 = vector.broadcast %49 : vector<8x1xf32> to vector<8x128xf32>
    %51 = vector.broadcast %cst_21 : f32 to vector<8x128xf32>
    %52 = arith.select %48, %50, %51 : vector<8x128xi1>, vector<8x128xf32>
    %53 = arith.addf %46, %52 : vector<8x128xf32>
    %c0_22 = arith.constant 0 : index
    %c0_23 = arith.constant 0 : index
    %54 = vector.load %arg7[%c0_22, %c0_23] : memref<8x128xf32, #tpu.memory_space<vmem>>, vector<8x128xf32>
    tpu.vector_store %arg7[%c0_22, %c0_23], %53 {strides = array<i32>} : memref<8x128xf32, #tpu.memory_space<vmem>>, vector<8x128xf32>,
    return
  }
  func.func @transform_0(%arg0: i32) -> (i32, i32) {
    %c0_i32 = arith.constant 0 : i32
    %c0_i32_0 = arith.constant 0 : i32
    return %arg0, %c0_i32 : i32, i32
  }
  func.func @transform_1(%arg0: i32) -> (i32, i32) {
    %c0_i32 = arith.constant 0 : i32
    %c0_i32_0 = arith.constant 0 : i32
    return %arg0, %c0_i32 : i32, i32
  }
  func.func @transform_2(%arg0: i32) -> (i32, i32) {
    %c0_i32 = arith.constant 0 : i32
    %c0_i32_0 = arith.constant 0 : i32
    %c0_i32_1 = arith.constant 0 : i32
    return %c0_i32, %c0_i32_0 : i32, i32
  }
  func.func @transform_3(%arg0: i32) -> (i32, i32) {
    %c0_i32 = arith.constant 0 : i32
    %c0_i32_0 = arith.constant 0 : i32
    %c0_i32_1 = arith.constant 0 : i32
    return %c0_i32, %c0_i32_0 : i32, i32
  }
  func.func @transform_4(%arg0: i32) -> (i32, i32) {
    %c0_i32 = arith.constant 0 : i32
    %c0_i32_0 = arith.constant 0 : i32
    %c0_i32_1 = arith.constant 0 : i32
    return %c0_i32, %c0_i32_0 : i32, i32
  }
  func.func @transform_5(%arg0: i32) -> (i32, i32) {
    %c0_i32 = arith.constant 0 : i32
    %c0_i32_0 = arith.constant 0 : i32
    %c0_i32_1 = arith.constant 0 : i32
    return %c0_i32, %c0_i32_0 : i32, i32
  }
  func.func @transform_6(%arg0: i32) -> (i32, i32) {
    %c0_i32 = arith.constant 0 : i32
    %c0_i32_0 = arith.constant 0 : i32
    return %arg0, %c0_i32 : i32, i32
  }
}

</mosaic_0001>

<llo_original>
// kernel: tpu_custom_call.1
$region0: #{tpu_custom_call.1}
  #allocation0 [shape = 'u32[]', space=smem, size = 0x4, offset = 0x4, fixed_abs, tag = 'smem constant byte address 0x4 - core index']
  #allocation1 [shape = 'u32[144,128]{1,0:T(1,128)}', space=vmem, size = 0x12000, scoped, tag = 'internal scratch']
  %s0 = inlined_call_operand.vmem [shape: f32[8,2], index: 0, kind: input, shape index: {}]
  %s1 = inlined_call_operand.vmem [shape: f32[8,1], index: 1, kind: input, shape index: {}]
  %s2 = inlined_call_operand.vmem [shape: f32[2,128], index: 2, kind: input, shape index: {}]
  %s3 = inlined_call_operand.hbm [shape: f32[128,128], index: 3, kind: input, shape index: {}]
  %s4 = inlined_call_operand.hbm [shape: f32[128,128], index: 4, kind: input, shape index: {}]
  %s5 = inlined_call_operand.vmem [shape: f32[4,128], index: 5, kind: input, shape index: {}]
  %s6 = inlined_call_operand.hbm [shape: f32[8,128], index: 6, kind: output, shape index: {}]
  %s7 = sld [smem:[#allocation0]]
  $region42: #{tpu_custom_call.1} parent=0
    _
  %s9 = ssub.s32 1, %s7
  %s10 = scalar_select 0, %s9, %s7
  $region1: #{tpu_custom_call.1} parent=0
    #allocation2 [shape = 'u8[65536]{0}', space=vmem, size = 0x10000, scoped, tag = 'input window, operand 3, single buffered']
    #allocation3 [shape = 's32[1]{0}', space=sflag, size = 0x4, scoped, tag = 'scoped memory for tpu_custom_call.1']
    #allocation4 [shape = 's32[1]{0}', space=sflag, size = 0x4, scoped, tag = 'scoped memory for tpu_custom_call.1']
    #allocation5 [shape = 'u8[65536]{0}', space=vmem, size = 0x10000, scoped, tag = 'input window, operand 4, single buffered']
    #allocation6 [shape = 's32[1]{0}', space=sflag, size = 0x4, scoped, tag = 'scoped memory for tpu_custom_call.1']
    #allocation7 [shape = 'u8[4096]{0}', space=vmem, size = 0x1000, scoped, tag = 'output window, operand 0, single buffered']
    %11 = vsyncpa [#allocation3], 0
    %12 = vsyncpa [#allocation6], 0
    %13 = vsyncpa [#allocation4], 0
    // Predicated region
    $region2: #{tpu_custom_call.1} parent=1 // pred_check
      _
    $region3: #{tpu_custom_call.1} parent=1 // pred_check_branch
      %15 = sbr.rel (0) target = $region5
    $region4: #{tpu_custom_call.1} parent=1 // pred_region
      _
    $region5: #{tpu_custom_call.1} parent=1 // pred_fallthru
      _
    // Predicated region
    $region6: #{tpu_custom_call.1} parent=1 // pred_check
      _
    $region7: #{tpu_custom_call.1} parent=1 // pred_check_branch
      %17 = sbr.rel (0) target = $region9
    $region8: #{tpu_custom_call.1} parent=1 // pred_region
      _
    $region9: #{tpu_custom_call.1} parent=1 // pred_fallthru
      _
    // Predicated region
    $region10: #{tpu_custom_call.1} parent=1 // pred_check
      _
    $region11: #{tpu_custom_call.1} parent=1 // pred_check_branch
      %19 = sbr.rel (0) target = $region13
    $region12: #{tpu_custom_call.1} parent=1 // pred_region
      _
    $region13: #{tpu_custom_call.1} parent=1 // pred_fallthru
      _
    // Predicated region
    $region14: #{tpu_custom_call.1} parent=1 // pred_check
      _
    $region15: #{tpu_custom_call.1} parent=1 // pred_check_branch
      %21 = sbr.rel (0) target = $region17
    $region16: #{tpu_custom_call.1} parent=1 // pred_region
      %s23 = ssub.s32 2048, 2048
      %24 = vsyncadd [#allocation3], %s23
      %s25 = sshll.u32 [#allocation2], 4
      %s26 = int_to_ptr.vmem [resolvable:$true] %s25
      %31 = dma.hbm_to_vmem [thread:$0]  %s3, 2048, %s26, [#allocation3], 128, 128, 8
    $region17: #{tpu_custom_call.1} parent=1 // pred_fallthru
      _
    // Predicated region
    $region18: #{tpu_custom_call.1} parent=1 // pred_check
      _
    $region19: #{tpu_custom_call.1} parent=1 // pred_check_branch
      %33 = sbr.rel (0) target = $region21
    $region20: #{tpu_custom_call.1} parent=1 // pred_region
      %s35 = ssub.s32 2048, 2048
      %36 = vsyncadd [#allocation6], %s35
      %s37 = sshll.u32 [#allocation5], 4
      %s38 = int_to_ptr.vmem [resolvable:$true] %s37
      %43 = dma.hbm_to_vmem [thread:$0]  %s4, 2048, %s38, [#allocation6], 128, 128, 8
    $region21: #{tpu_custom_call.1} parent=1 // pred_fallthru
      _
    // Predicated region
    $region22: #{tpu_custom_call.1} parent=1 // pred_check
      _
    $region23: #{tpu_custom_call.1} parent=1 // pred_check_branch
      %45 = sbr.rel (0) target = $region25
    $region24: #{tpu_custom_call.1} parent=1 // pred_region
      _
    $region25: #{tpu_custom_call.1} parent=1 // pred_fallthru
      _
    // Predicated region
    $region26: #{tpu_custom_call.1} parent=1 // pred_check
      _
    $region27: #{tpu_custom_call.1} parent=1 // pred_check_branch
      %47 = sbr.rel (0) target = $region29
    $region28: #{tpu_custom_call.1} parent=1 // pred_region
      %48 = dma.done [#allocation3], 2048
    $region29: #{tpu_custom_call.1} parent=1 // pred_fallthru
      _
    // Predicated region
    $region30: #{tpu_custom_call.1} parent=1 // pred_check
      _
    $region31: #{tpu_custom_call.1} parent=1 // pred_check_branch
      %50 = sbr.rel (0) target = $region33
    $region32: #{tpu_custom_call.1} parent=1 // pred_region
      %51 = dma.done [#allocation6], 2048
    $region33: #{tpu_custom_call.1} parent=1 // pred_fallthru
      _
    %v52 = vld [vmem:[%s0] sm:$0xff]
    %v53 = vld [vmem:[%s5] sm:$0x1]
    %v54 = vld [vmem:[%s5 + $0x1] sm:$0x1]
    %v55 = vld [vmem:[%s5 + $0x2] sm:$0x1]
    %v56 = vld [vmem:[%s5 + $0x3] sm:$0x1]
    %v57 = vld [vmem:[%s2] sm:$0x3]
    %v58 = vlaneseq
    %v59 = vshrl.u32 %v58, 7
    %v60 = vsub.s32 0, %v59
    %v61 = vrot.slane %v53, %v60
    %vm62 = vcmask 15360
    %v64 = vsel %vm62, %v52, 0
    %vm66 = vcmask 1041408
    %v68 = vsel %vm66, %v57, 0
    %70 = vmatprep.subr.mxu0 0.0
    %71 = vmatpush1.msra.mxu0 %v68
    %72 = vmatprep.subr.mxu0 0.0
    %73 = vmatpush1.msra.mxu0 0.0
    %74 = vmatprep.subr.mxu0 0.0
    %75 = vmatpush1.msra.mxu0 0.0
    %76 = vmatprep.subr.mxu0 0.0
    %77 = vmatpush1.msra.mxu0 0.0
    %78 = vmatprep.subr.mxu0 0.0
    %79 = vmatpush1.msra.mxu0 0.0
    %80 = vmatprep.subr.mxu0 0.0
    %81 = vmatpush1.msra.mxu0 0.0
    %82 = vmatprep.subr.mxu0 0.0
    %83 = vmatpush1.msra.mxu0 0.0
    %84 = vmatprep.subr.mxu0 0.0
    %85 = vmatpush1.msra.mxu0 0.0
    %86 = vmatprep.subr.mxu0 0.0
    %87 = vmatpush1.msra.mxu0 0.0
    %88 = vmatprep.subr.mxu0 0.0
    %89 = vmatpush1.msra.mxu0 0.0
    %90 = vmatprep.subr.mxu0 0.0
    %91 = vmatpush1.msra.mxu0 0.0
    %92 = vmatprep.subr.mxu0 0.0
    %93 = vmatpush1.msra.mxu0 0.0
    %94 = vmatprep.subr.mxu0 0.0
    %95 = vmatpush1.msra.mxu0 0.0
    %96 = vmatprep.subr.mxu0 0.0
    %97 = vmatpush1.msra.mxu0 0.0
    %98 = vmatprep.subr.mxu0 0.0
    %99 = vmatpush1.msra.mxu0 0.0
    %100 = vmatprep.subr.mxu0 0.0
    %101 = vmatpush1.msra.mxu0 0.0
    %102 = vmatprep.subr.mxu0 0.0
    %103 = vmatpush1.msra.mxu0 0.0
    %104 = vmatprep.subr.mxu0 0.0
    %105 = vmatpush1.msra.mxu0 0.0
    %106 = vmatprep.subr.mxu0 0.0
    %107 = vmatpush1.msra.mxu0 0.0
    %108 = vmatprep.subr.mxu0 0.0
    %109 = vmatpush1.msra.mxu0 0.0
    %110 = vmatprep.subr.mxu0 0.0
    %111 = vmatpush1.msra.mxu0 0.0
    %112 = vmatprep.subr.mxu0 0.0
    %113 = vmatpush1.msra.mxu0 0.0
    %114 = vmatprep.subr.mxu0 0.0
    %115 = vmatpush1.msra.mxu0 0.0
    %116 = vmatprep.subr.mxu0 0.0
    %117 = vmatpush1.msra.mxu0 0.0
    %118 = vmatprep.subr.mxu0 0.0
    %119 = vmatpush1.msra.mxu0 0.0
    %120 = vmatprep.subr.mxu0 0.0
    %121 = vmatpush1.msra.mxu0 0.0
    %122 = vmatprep.subr.mxu0 0.0
    %123 = vmatpush1.msra.mxu0 0.0
    %124 = vmatprep.subr.mxu0 0.0
    %125 = vmatpush1.msra.mxu0 0.0
    %126 = vmatprep.subr.mxu0 0.0
    %127 = vmatpush1.msra.mxu0 0.0
    %128 = vmatprep.subr.mxu0 0.0
    %129 = vmatpush1.msra.mxu0 0.0
    %130 = vmatprep.subr.mxu0 0.0
    %131 = vmatpush1.msra.mxu0 0.0
    %132 = vmatprep.subr.mxu0 0.0
    %133 = vmatpush1.msra.mxu0 0.0
    %134 = vmatprep.mubr.f32.mxu0 0.0
    %135 = vmatmul.mubr.f32.gmra.mrb[0].mxu0 %v64
    %v136 = vpop.f32.mrb[0].mxu0
    %v137 = vadd.f32 %v61, %v136
    %v138 = vpop.f32.mrb[0].mxu0
    %139 = vdwg.mxu0
    %v140 = vtanh.pop %v137
    %v141 = vld [vmem:[#allocation2] sm:$0xff]
    %v142 = vld [vmem:[#allocation2 + $0x8] sm:$0xff]
    %v143 = vld [vmem:[#allocation2 + $0x10] sm:$0xff]
    %v144 = vld [vmem:[#allocation2 + $0x18] sm:$0xff]
    %v145 = vld [vmem:[#allocation2 + $0x20] sm:$0xff]
    %v146 = vld [vmem:[#allocation2 + $0x28] sm:$0xff]
    %v147 = vld [vmem:[#allocation2 + $0x30] sm:$0xff]
    %v148 = vld [vmem:[#allocation2 + $0x38] sm:$0xff]
    %v149 = vld [vmem:[#allocation2 + $0x40] sm:$0xff]
    %v150 = vld [vmem:[#allocation2 + $0x48] sm:$0xff]
    %v151 = vld [vmem:[#allocation2 + $0x50] sm:$0xff]
    %v152 = vld [vmem:[#allocation2 + $0x58] sm:$0xff]
    %v153 = vld [vmem:[#allocation2 + $0x60] sm:$0xff]
    %v154 = vld [vmem:[#allocation2 + $0x68] sm:$0xff]
    %v155 = vld [vmem:[#allocation2 + $0x70] sm:$0xff]
    %v156 = vld [vmem:[#allocation2 + $0x78] sm:$0xff]
    %v157 = vlaneseq
    %v158 = vshrl.u32 %v157, 7
    %v159 = vsub.s32 0, %v158
    %v160 = vrot.slane %v54, %v159
    %161 = vmatprep.subr.mxu0 0.0
    %162 = vmatpush1.msra.mxu0 %v141
    %163 = vmatprep.subr.mxu0 0.0
    %164 = vmatpush1.msra.mxu0 %v142
    %165 = vmatprep.subr.mxu0 0.0
    %166 = vmatpush1.msra.mxu0 %v143
    %167 = vmatprep.subr.mxu0 0.0
    %168 = vmatpush1.msra.mxu0 %v144
    %169 = vmatprep.subr.mxu0 0.0
    %170 = vmatpush1.msra.mxu0 %v145
    %171 = vmatprep.subr.mxu0 0.0
    %172 = vmatpush1.msra.mxu0 %v146
    %173 = vmatprep.subr.mxu0 0.0
    %174 = vmatpush1.msra.mxu0 %v147
    %175 = vmatprep.subr.mxu0 0.0
    %176 = vmatpush1.msra.mxu0 %v148
    %177 = vmatprep.subr.mxu0 0.0
    %178 = vmatpush1.msra.mxu0 %v149
    %179 = vmatprep.subr.mxu0 0.0
    %180 = vmatpush1.msra.mxu0 %v150
    %181 = vmatprep.subr.mxu0 0.0
    %182 = vmatpush1.msra.mxu0 %v151
    %183 = vmatprep.subr.mxu0 0.0
    %184 = vmatpush1.msra.mxu0 %v152
    %185 = vmatprep.subr.mxu0 0.0
    %186 = vmatpush1.msra.mxu0 %v153
    %187 = vmatprep.subr.mxu0 0.0
    %188 = vmatpush1.msra.mxu0 %v154
    %189 = vmatprep.subr.mxu0 0.0
    %190 = vmatpush1.msra.mxu0 %v155
    %191 = vmatprep.subr.mxu0 0.0
    %192 = vmatpush1.msra.mxu0 %v156
    %193 = vmatprep.subr.mxu0 0.0
    %194 = vmatpush1.msra.mxu0 0.0
    %195 = vmatprep.subr.mxu0 0.0
    %196 = vmatpush1.msra.mxu0 0.0
    %197 = vmatprep.subr.mxu0 0.0
    %198 = vmatpush1.msra.mxu0 0.0
    %199 = vmatprep.subr.mxu0 0.0
    %200 = vmatpush1.msra.mxu0 0.0
    %201 = vmatprep.subr.mxu0 0.0
    %202 = vmatpush1.msra.mxu0 0.0
    %203 = vmatprep.subr.mxu0 0.0
    %204 = vmatpush1.msra.mxu0 0.0
    %205 = vmatprep.subr.mxu0 0.0
    %206 = vmatpush1.msra.mxu0 0.0
    %207 = vmatprep.subr.mxu0 0.0
    %208 = vmatpush1.msra.mxu0 0.0
    %209 = vmatprep.subr.mxu0 0.0
    %210 = vmatpush1.msra.mxu0 0.0
    %211 = vmatprep.subr.mxu0 0.0
    %212 = vmatpush1.msra.mxu0 0.0
    %213 = vmatprep.subr.mxu0 0.0
    %214 = vmatpush1.msra.mxu0 0.0
    %215 = vmatprep.subr.mxu0 0.0
    %216 = vmatpush1.msra.mxu0 0.0
    %217 = vmatprep.subr.mxu0 0.0
    %218 = vmatpush1.msra.mxu0 0.0
    %219 = vmatprep.subr.mxu0 0.0
    %220 = vmatpush1.msra.mxu0 0.0
    %221 = vmatprep.subr.mxu0 0.0
    %222 = vmatpush1.msra.mxu0 0.0
    %223 = vmatprep.subr.mxu0 0.0
    %224 = vmatpush1.msra.mxu0 0.0
    %225 = vmatprep.mubr.f32.mxu0 0.0
    %226 = vmatmul.mubr.f32.gmra.mrb[0].mxu0 %v140
    %v227 = vpop.f32.mrb[0].mxu0
    %v228 = vadd.f32 %v160, %v227
    %v229 = vpop.f32.mrb[0].mxu0
    %230 = vdwg.mxu0
    %v231 = vtanh.pop %v228
    %v232 = vld [vmem:[#allocation5] sm:$0xff]
    %v233 = vld [vmem:[#allocation5 + $0x8] sm:$0xff]
    %v234 = vld [vmem:[#allocation5 + $0x10] sm:$0xff]
    %v235 = vld [vmem:[#allocation5 + $0x18] sm:$0xff]
    %v236 = vld [vmem:[#allocation5 + $0x20] sm:$0xff]
    %v237 = vld [vmem:[#allocation5 + $0x28] sm:$0xff]
    %v238 = vld [vmem:[#allocation5 + $0x30] sm:$0xff]
    %v239 = vld [vmem:[#allocation5 + $0x38] sm:$0xff]
    %v240 = vld [vmem:[#allocation5 + $0x40] sm:$0xff]
    %v241 = vld [vmem:[#allocation5 + $0x48] sm:$0xff]
    %v242 = vld [vmem:[#allocation5 + $0x50] sm:$0xff]
    %v243 = vld [vmem:[#allocation5 + $0x58] sm:$0xff]
    %v244 = vld [vmem:[#allocation5 + $0x60] sm:$0xff]
    %v245 = vld [vmem:[#allocation5 + $0x68] sm:$0xff]
    %v246 = vld [vmem:[#allocation5 + $0x70] sm:$0xff]
    %v247 = vld [vmem:[#allocation5 + $0x78] sm:$0xff]
    %v248 = vlaneseq
    %v249 = vshrl.u32 %v248, 7
    %v250 = vsub.s32 0, %v249
    %v251 = vrot.slane %v55, %v250
    %252 = vmatprep.subr.mxu0 0.0
    %253 = vmatpush1.msra.mxu0 %v232
    %254 = vmatprep.subr.mxu0 0.0
    %255 = vmatpush1.msra.mxu0 %v233
    %256 = vmatprep.subr.mxu0 0.0
    %257 = vmatpush1.msra.mxu0 %v234
    %258 = vmatprep.subr.mxu0 0.0
    %259 = vmatpush1.msra.mxu0 %v235
    %260 = vmatprep.subr.mxu0 0.0
    %261 = vmatpush1.msra.mxu0 %v236
    %262 = vmatprep.subr.mxu0 0.0
    %263 = vmatpush1.msra.mxu0 %v237
    %264 = vmatprep.subr.mxu0 0.0
    %265 = vmatpush1.msra.mxu0 %v238
    %266 = vmatprep.subr.mxu0 0.0
    %267 = vmatpush1.msra.mxu0 %v239
    %268 = vmatprep.subr.mxu0 0.0
    %269 = vmatpush1.msra.mxu0 %v240
    %270 = vmatprep.subr.mxu0 0.0
    %271 = vmatpush1.msra.mxu0 %v241
    %272 = vmatprep.subr.mxu0 0.0
    %273 = vmatpush1.msra.mxu0 %v242
    %274 = vmatprep.subr.mxu0 0.0
    %275 = vmatpush1.msra.mxu0 %v243
    %276 = vmatprep.subr.mxu0 0.0
    %277 = vmatpush1.msra.mxu0 %v244
    %278 = vmatprep.subr.mxu0 0.0
    %279 = vmatpush1.msra.mxu0 %v245
    %280 = vmatprep.subr.mxu0 0.0
    %281 = vmatpush1.msra.mxu0 %v246
    %282 = vmatprep.subr.mxu0 0.0
    %283 = vmatpush1.msra.mxu0 %v247
    %284 = vmatprep.subr.mxu0 0.0
    %285 = vmatpush1.msra.mxu0 0.0
    %286 = vmatprep.subr.mxu0 0.0
    %287 = vmatpush1.msra.mxu0 0.0
    %288 = vmatprep.subr.mxu0 0.0
    %289 = vmatpush1.msra.mxu0 0.0
    %290 = vmatprep.subr.mxu0 0.0
    %291 = vmatpush1.msra.mxu0 0.0
    %292 = vmatprep.subr.mxu0 0.0
    %293 = vmatpush1.msra.mxu0 0.0
    %294 = vmatprep.subr.mxu0 0.0
    %295 = vmatpush1.msra.mxu0 0.0
    %296 = vmatprep.subr.mxu0 0.0
    %297 = vmatpush1.msra.mxu0 0.0
    %298 = vmatprep.subr.mxu0 0.0
    %299 = vmatpush1.msra.mxu0 0.0
    %300 = vmatprep.subr.mxu0 0.0
    %301 = vmatpush1.msra.mxu0 0.0
    %302 = vmatprep.subr.mxu0 0.0
    %303 = vmatpush1.msra.mxu0 0.0
    %304 = vmatprep.subr.mxu0 0.0
    %305 = vmatpush1.msra.mxu0 0.0
    %306 = vmatprep.subr.mxu0 0.0
    %307 = vmatpush1.msra.mxu0 0.0
    %308 = vmatprep.subr.mxu0 0.0
    %309 = vmatpush1.msra.mxu0 0.0
    %310 = vmatprep.subr.mxu0 0.0
    %311 = vmatpush1.msra.mxu0 0.0
    %312 = vmatprep.subr.mxu0 0.0
    %313 = vmatpush1.msra.mxu0 0.0
    %314 = vmatprep.subr.mxu0 0.0
    %315 = vmatpush1.msra.mxu0 0.0
    %316 = vmatprep.mubr.f32.mxu0 0.0
    %317 = vmatmul.mubr.f32.gmra.mrb[0].mxu0 %v231
    %v318 = vpop.f32.mrb[0].mxu0
    %v319 = vadd.f32 %v251, %v318
    %v320 = vpop.f32.mrb[0].mxu0
    %321 = vdwg.mxu0
    %v322 = vtanh.pop %v319
    %v323 = vld [vmem:[%s1] sm:$0xff]
    %v324 = vsub.f32 %v323, %v322
    %v325 = vmul.f32 %v324, %v324
    %v326 = vlaneseq
    %v327 = vshrl.u32 %v326, 7
    %v328 = vsub.s32 0, %v327
    %v329 = vrot.slane %v56, %v328
    %v330 = vmul.f32 %v325, %v329
    %v331 = vadd.f32 %v330, 0.0
    %v332 = vmul.f32 %v331, -0.5
    %334 = vrot.lane.b32.xlu0 %v329, 127
    %v335 = vpop.permute.xlu0 %334
    %v337 = vadd.f32 %v332, %v335
    %v338 = vlaneseq
    %v339 = vand.u32 %v338, 127
    %vm340 = vcmp.lt.s32.totalorder %v339, 1
    %v341 = vsel %vm340, %v322, 0.0
    %vm342 = vcmp.eq.s32.totalorder %v339, 1
    %344 = vset.pattern.permute.xlu0 0
    %345 = vperm.xlu0 %344, %v337
    %v346 = vpop.permute.xlu0 %345
    %v348 = vsel %vm342, %v346, 0.0
    %v349 = vadd.f32 %v341, %v348
    %vm350 = vcmp.eq.s32.totalorder %v339, 2
    %352 = vset.pattern.permute.xlu0 1
    %353 = vperm.xlu0 %352, %v319
    %v354 = vpop.permute.xlu0 %353
    %v356 = vsel %vm350, %v354, 0.0
    %v357 = vadd.f32 %v349, %v356
    %358 = vst [vmem:[#allocation7] sm:$0xff] %v357
    // Predicated region
    $region34: #{tpu_custom_call.1} parent=1 // pred_check
      _
    $region35: #{tpu_custom_call.1} parent=1 // pred_check_branch
      %360 = sbr.rel (0) target = $region37
    $region36: #{tpu_custom_call.1} parent=1 // pred_region
      %s362 = ssub.s32 128, 128
      %363 = vsyncadd [#allocation4], %s362
      %s365 = sshll.u32 [#allocation7], 4
      %s366 = int_to_ptr.vmem [resolvable:$true] %s365
      %368 = dma.vmem_to_hbm [thread:$0]  %s366, 128, %s6, [#allocation4]
    $region37: #{tpu_custom_call.1} parent=1 // pred_fallthru
      _
    // Predicated region
    $region38: #{tpu_custom_call.1} parent=1 // pred_check
      _
    $region39: #{tpu_custom_call.1} parent=1 // pred_check_branch
      %370 = sbr.rel (0) target = $region41
    $region40: #{tpu_custom_call.1} parent=1 // pred_region
      %371 = dma.done [#allocation4], 128
    $region41: #{tpu_custom_call.1} parent=1 // pred_fallthru
      _
    %372 = vsyncpa [#allocation3], 1
    %373 = vsyncpa [#allocation6], 1
    %374 = vsyncpa [#allocation4], 1

</llo_original>
